<compile_context>
chip_gen: v7x
topology: tpu7x:2x2x1
jax: 0.10.0
libtpu: 0.0.40
codegen_flags: <defaults>
</compile_context>

<pallas_src>
import functools

import jax
import jax.numpy as jnp
from jax.experimental import pallas as pl
from jax.experimental.pallas import tpu as pltpu


def _local_cnn_kernel(x_ref, w_ref, b_ref, o_ref):
    # x_ref: (1, C, TN)  channels on sublanes, spatial positions on lanes
    # w_ref: (L, C)      composed per-branch weights  (w2_i @ W1_i)
    # b_ref: (L, 1)      composed per-branch biases   (w2_i @ b1_i + b2_i)
    # o_ref: (1, 1, TN)  sigmoid(max over branches of logits), lane-dense
    x = x_ref[0]                                           # (C, TN)
    C = x.shape[0]
    # Unrolled VPU multiply-accumulate over the tiny channel axis (C ~ 4).
    # Bias is folded into the accumulator init; (L,1)x(1,TN) broadcasts.
    acc = b_ref[...] + w_ref[:, 0:1] * x[0:1, :]           # (L, TN) f32
    for c in range(1, C):
        acc = acc + w_ref[:, c:c + 1] * x[c:c + 1, :]
    # Max over the L branch rows (sublane reduce) FIRST, then a single row of
    # sigmoid (exact: sigmoid is monotone, so max(sigmoid) == sigmoid(max)).
    z = jnp.max(acc, axis=0, keepdims=True)                # (1, TN)
    o_ref[0] = jax.nn.sigmoid(z).astype(o_ref.dtype)


def _round_up(n, m):
    return (n + m - 1) // m * m


def _choose_tile(HW, B, tile_cap):
    """Pick the spatial (lane) tile: multiple of 128, or the full extent HW."""
    assert tile_cap % 128 == 0 and tile_cap > 0, "tile_n must be a multiple of 128"
    if HW <= 128:
        return HW                      # single full-extent block
    cap = tile_cap
    if B == 1:
        # Ensure >= 2 spatial grid steps so both v7x TensorCores get work.
        cap = min(cap, max(128, _round_up((HW + 1) // 2, 128)))
    if HW <= cap:
        return HW                      # full-extent block (allowed even if HW % 128 != 0)
    return cap                         # multiple of 128; last block partial (masked)


@functools.partial(jax.jit, static_argnames=("tile_n",))
def local_cnn_forward(x_nchw, w1, b1, w2, b2, *, tile_n=32768):
    """Forward pass of LocalCNN (use_mad=False).

    x_nchw: (B, C, H, W)
    w1: (L, Cmid, C), b1: (L, Cmid)   -- first 1x1 conv per branch (trailing 1x1 squeezed)
    w2: (L, 1, Cmid), b2: (L, 1)      -- second 1x1 conv per branch
    Returns (B, 1, H, W).
    """
    B, C, H, W = x_nchw.shape
    L, Cmid, _ = w1.shape
    HW = H * W

    # ---- parameter composition (plain JAX glue, O(L*C*Cmid) -- negligible) ----
    w2v = w2[:, 0, :]                                          # (L, Cmid)
    w_eff = jnp.einsum("lm,lmc->lc", w2v, w1)                  # (L, C)
    b_eff = (jnp.einsum("lm,lm->l", w2v, b1) + b2[:, 0]).reshape(L, 1)  # (L, 1)

    # ---- layout: channels on sublanes, spatial on lanes (free reshape) ----
    x_r = x_nchw.reshape(B, C, HW)

    tile = _choose_tile(HW, B, tile_n)
    n_spatial = pl.cdiv(HW, tile)
    grid = (B, n_spatial)   # both parallel -> work for both v7x TensorCores

    # Explicit VMEM budget: double-buffered input + output tiles (sublane-
    # padded to 8 rows, f32) plus generous headroom; fits v5e/v6e/v7x.
    itemsize = jnp.dtype(x_nchw.dtype).itemsize
    row_bytes = 8 * tile * itemsize
    vmem_budget = int(min(max(6 * row_bytes + (4 << 20), 16 << 20), 64 << 20))

    out = pl.pallas_call(
        _local_cnn_kernel,
        out_shape=jax.ShapeDtypeStruct((B, 1, HW), x_nchw.dtype),
        grid_spec=pltpu.PrefetchScalarGridSpec(
            num_scalar_prefetch=0,
            grid=grid,
            in_specs=[
                pl.BlockSpec((1, C, tile), lambda b, j: (b, 0, j)),
                pl.BlockSpec((L, C), lambda b, j: (0, 0)),
                pl.BlockSpec((L, 1), lambda b, j: (0, 0)),
            ],
            out_specs=pl.BlockSpec((1, 1, tile), lambda b, j: (b, 0, j)),
        ),
        compiler_params=pltpu.CompilerParams(
            dimension_semantics=("parallel", "parallel"),
            vmem_limit_bytes=vmem_budget),
    )(x_r, w_eff, b_eff)

    # (B, 1, HW) -> (B, 1, H, W); reshape is free, no transpose, no slicing.
    return out.reshape(B, 1, H, W)


def _reference_forward(x_nchw, w1, b1, w2, b2):
    """Pure-JAX reference mirroring the PyTorch module loop (two convs per branch)."""
    B, C, H, W = x_nchw.shape
    L, Cmid, _ = w1.shape
    x = jnp.transpose(x_nchw, (0, 2, 3, 1))                    # (B, H, W, C)
    outs = []
    for i in range(L):
        h = jnp.einsum("bhwc,oc->bhwo", x, w1[i]) + b1[i]      # (B, H, W, Cmid)
        o = jnp.einsum("bhwm,om->bhwo", h, w2[i]) + b2[i]      # (B, H, W, 1)
        outs.append(o[..., 0])
    stacked = jnp.stack(outs, axis=1)                          # (B, L, H, W)
    return jnp.max(jax.nn.sigmoid(stacked), axis=1, keepdims=True)


if __name__ == "__main__":
    # Small shapes consistent with the module: in_channel=4, H=W=16, B=2,
    # local_attention_num=12, channel_reduction_rate=2 -> Cmid=2.
    B, C, H, W = 2, 4, 16, 16
    L, reduction = 12, 2
    Cmid = C // reduction

    key = jax.random.PRNGKey(0)
    kx, k1, k2, k3, k4 = jax.random.split(key, 5)

    x = jax.random.normal(kx, (B, C, H, W), dtype=jnp.float32)

    # Deterministic synthetic parameters (1x1 conv weights with trailing 1x1 squeezed).
    w1 = 0.3 * jax.random.normal(k1, (L, Cmid, C), dtype=jnp.float32)
    b1 = 0.1 * jax.random.normal(k2, (L, Cmid), dtype=jnp.float32)
    w2 = 0.3 * jax.random.normal(k3, (L, 1, Cmid), dtype=jnp.float32)
    b2 = 0.1 * jax.random.normal(k4, (L, 1), dtype=jnp.float32)

    # TODO(synk): MAD (use_mad=True) randomly zeroes one branch per sample in
    # place before the max; omitted since use_mad defaults to False.

    out = local_cnn_forward(x, w1, b1, w2, b2)
    out = jax.block_until_ready(out)

    ref = _reference_forward(x, w1, b1, w2, b2)
    assert out.shape == (B, 1, H, W)
    assert jnp.allclose(out, ref, atol=1e-5, rtol=1e-5), float(
        jnp.max(jnp.abs(out - ref)))

    print("KERNEL_OK")
</pallas_src>

<mosaic_0001>
module attributes {stable_mosaic.version = 11 : i64} {
  func.func @_local_cnn_kernel(%arg0: i32, %arg1: i32, %arg2: memref<1x4x256xf32, #tpu.memory_space<vmem>>, %arg3: memref<12x4xf32, #tpu.memory_space<vmem>>, %arg4: memref<12x1xf32, #tpu.memory_space<vmem>>, %arg5: memref<1x1x256xf32, #tpu.memory_space<vmem>>) attributes {dimension_semantics = [#tpu.dimension_semantics<parallel>, #tpu.dimension_semantics<parallel>], iteration_bounds = array<i64: 2, 1>, scalar_prefetch = 0 : i64, scratch_operands = 0 : i64, tpu.core_type = #tpu.core_type<tc>, window_params = [{transform_indices = @transform_0, window_bounds = array<i64: 1, 4, 256>}, {pipeline_mode = #tpu.pipeline_mode<synchronous>, transform_indices = @transform_1, window_bounds = array<i64: 12, 4>}, {pipeline_mode = #tpu.pipeline_mode<synchronous>, transform_indices = @transform_2, window_bounds = array<i64: 12, 1>}, {transform_indices = @transform_3, window_bounds = array<i64: 1, 1, 256>}]} {
    %c0 = arith.constant 0 : index
    %c0_0 = arith.constant 0 : index
    %c0_1 = arith.constant 0 : index
    %0 = vector.load %arg2[%c0, %c0_0, %c0_1] : memref<1x4x256xf32, #tpu.memory_space<vmem>>, vector<1x4x256xf32>
    %1 = vector.shape_cast %0 : vector<1x4x256xf32> to vector<4x256xf32>
    %c0_2 = arith.constant 0 : index
    %c0_3 = arith.constant 0 : index
    %2 = vector.load %arg4[%c0_2, %c0_3] : memref<12x1xf32, #tpu.memory_space<vmem>>, vector<12x1xf32>
    %c0_4 = arith.constant 0 : index
    %c0_5 = arith.constant 0 : index
    %3 = vector.load %arg3[%c0_4, %c0_5] : memref<12x4xf32, #tpu.memory_space<vmem>>, vector<12x1xf32>
    %4 = vector.extract_strided_slice %1 {offsets = [0, 0], sizes = [1, 256], strides = [1, 1]} : vector<4x256xf32> to vector<1x256xf32>
    %5 = vector.broadcast %3 : vector<12x1xf32> to vector<12x256xf32>
    %6 = vector.broadcast %4 : vector<1x256xf32> to vector<12x256xf32>
    %7 = arith.mulf %5, %6 : vector<12x256xf32>
    %8 = vector.broadcast %2 : vector<12x1xf32> to vector<12x256xf32>
    %9 = arith.addf %8, %7 : vector<12x256xf32>
    %c0_6 = arith.constant 0 : index
    %c1 = arith.constant 1 : index
    %10 = vector.load %arg3[%c0_6, %c1] : memref<12x4xf32, #tpu.memory_space<vmem>>, vector<12x1xf32>
    %11 = vector.extract_strided_slice %1 {offsets = [1, 0], sizes = [1, 256], strides = [1, 1]} : vector<4x256xf32> to vector<1x256xf32>
    %12 = vector.broadcast %10 : vector<12x1xf32> to vector<12x256xf32>
    %13 = vector.broadcast %11 : vector<1x256xf32> to vector<12x256xf32>
    %14 = arith.mulf %12, %13 : vector<12x256xf32>
    %15 = arith.addf %9, %14 : vector<12x256xf32>
    %c0_7 = arith.constant 0 : index
    %c2 = arith.constant 2 : index
    %16 = vector.load %arg3[%c0_7, %c2] : memref<12x4xf32, #tpu.memory_space<vmem>>, vector<12x1xf32>
    %17 = vector.extract_strided_slice %1 {offsets = [2, 0], sizes = [1, 256], strides = [1, 1]} : vector<4x256xf32> to vector<1x256xf32>
    %18 = vector.broadcast %16 : vector<12x1xf32> to vector<12x256xf32>
    %19 = vector.broadcast %17 : vector<1x256xf32> to vector<12x256xf32>
    %20 = arith.mulf %18, %19 : vector<12x256xf32>
    %21 = arith.addf %15, %20 : vector<12x256xf32>
    %c0_8 = arith.constant 0 : index
    %c3 = arith.constant 3 : index
    %22 = vector.load %arg3[%c0_8, %c3] : memref<12x4xf32, #tpu.memory_space<vmem>>, vector<12x1xf32>
    %23 = vector.extract_strided_slice %1 {offsets = [3, 0], sizes = [1, 256], strides = [1, 1]} : vector<4x256xf32> to vector<1x256xf32>
    %24 = vector.broadcast %22 : vector<12x1xf32> to vector<12x256xf32>
    %25 = vector.broadcast %23 : vector<1x256xf32> to vector<12x256xf32>
    %26 = arith.mulf %24, %25 : vector<12x256xf32>
    %27 = arith.addf %21, %26 : vector<12x256xf32>
    %cst = arith.constant dense<0xFF800000> : vector<256xf32>
    %28 = vector.multi_reduction <maximumf>, %27, %cst [0] : vector<12x256xf32> to vector<256xf32>
    %29 = vector.shape_cast %28 : vector<256xf32> to vector<1x256xf32>
    %30 = arith.negf %29 : vector<1x256xf32>
    %31 = math.exp %30 : vector<1x256xf32>
    %cst_9 = arith.constant 1.000000e+00 : f32
    %32 = vector.broadcast %cst_9 : f32 to vector<1x256xf32>
    %33 = arith.addf %32, %31 : vector<1x256xf32>
    %34 = arith.divf %32, %33 : vector<1x256xf32>
    %c0_10 = arith.constant 0 : index
    %c0_11 = arith.constant 0 : index
    %c0_12 = arith.constant 0 : index
    %35 = vector.load %arg5[%c0_10, %c0_11, %c0_12] : memref<1x1x256xf32, #tpu.memory_space<vmem>>, vector<1x1x256xf32>
    %36 = vector.shape_cast %35 : vector<1x1x256xf32> to vector<1x256xf32>
    %37 = vector.shape_cast %34 : vector<1x256xf32> to vector<1x1x256xf32>
    tpu.vector_store %arg5[%c0_10, %c0_11, %c0_12], %37 {strides = array<i32>} : memref<1x1x256xf32, #tpu.memory_space<vmem>>, vector<1x1x256xf32>,
    return
  }
  func.func @transform_0(%arg0: i32, %arg1: i32) -> (i32, i32, i32) {
    %c0_i32 = arith.constant 0 : i32
    %c0_i32_0 = arith.constant 0 : i32
    return %arg0, %c0_i32, %arg1 : i32, i32, i32
  }
  func.func @transform_1(%arg0: i32, %arg1: i32) -> (i32, i32) {
    %c0_i32 = arith.constant 0 : i32
    %c0_i32_0 = arith.constant 0 : i32
    %c0_i32_1 = arith.constant 0 : i32
    return %c0_i32, %c0_i32_0 : i32, i32
  }
  func.func @transform_2(%arg0: i32, %arg1: i32) -> (i32, i32) {
    %c0_i32 = arith.constant 0 : i32
    %c0_i32_0 = arith.constant 0 : i32
    %c0_i32_1 = arith.constant 0 : i32
    return %c0_i32, %c0_i32_0 : i32, i32
  }
  func.func @transform_3(%arg0: i32, %arg1: i32) -> (i32, i32, i32) {
    %c0_i32 = arith.constant 0 : i32
    %c0_i32_0 = arith.constant 0 : i32
    return %arg0, %c0_i32, %arg1 : i32, i32, i32
  }
}

</mosaic_0001>

<llo_original>
// kernel: local_cnn_forward.1
$region0: #{local_cnn_forward.1}
  #allocation0 [shape = 'u32[]', space=smem, size = 0x4, offset = 0x4, fixed_abs, tag = 'smem constant byte address 0x4 - core index']
  #allocation1 [shape = 'u32[144,128]{1,0:T(1,128)}', space=vmem, size = 0x12000, scoped, tag = 'internal scratch']
  %s0 = inlined_call_operand.vmem [shape: f32[2,4,256], index: 0, kind: input, shape index: {}]
  %s1 = inlined_call_operand.vmem [shape: f32[12,4], index: 1, kind: input, shape index: {}]
  %s2 = inlined_call_operand.vmem [shape: f32[12,1], index: 2, kind: input, shape index: {}]
  %s3 = inlined_call_operand.vmem [shape: f32[2,1,256], index: 3, kind: output, shape index: {}]
  %s4 = sld [smem:[#allocation0]]
  $region45: #{local_cnn_forward.1} parent=0
    _
  %s6 = ssub.s32 1, %s4
  %s7 = scalar_select 0, %s6, %s4
  loop: start=0, step=1, limit=4
  $region2: #{local_cnn_forward.1} parent=0 // loop_pre_header
    _
  $region3: #{local_cnn_forward.1} parent=0 // loop_header
    %s9 = sphi 0, %s13
    %p10 = scmp.ge.s32.totalorder %s9, 4
    %s16 = sphi 0, %s28
    %s17 = sphi 0, %s24
    %s18 = sphi 0, %s16
    %s19 = sphi 0, %s17
    %s20 = sphi 0, %s18
    %s21 = sphi 0, %s19
    %s33 = sphi 0, %s35
    %s36 = sphi 0, %s33
    %s37 = sphi 0, %s36
    %s53 = sphi 0, %s37
    %s57 = sphi 0, %s57
    %s59 = sphi 0, %s57
    %s60 = sphi 0, %s59
    %s74 = sphi 0, %s60
    %s78 = sphi 0, %s78
    %s80 = sphi 0, %s78
    %s81 = sphi 0, %s80
    %s95 = sphi 0, %s81
    %s103 = sphi 0, %s105
    %s106 = sphi 0, %s103
    %s107 = sphi 0, %s106
    %s123 = sphi 0, %s107
  $region4: #{local_cnn_forward.1} parent=0 // loop_header_branch
    %12 = sbr.rel (%p10) target = $region8
  $region5: #{local_cnn_forward.1} parent=0 // loop_body
    %s14 = ssub.s32 %s9, 1
    %s15 = ssub.s32 %s9, 2
    %s22 = sadd.s32 1, %s17
    %p23 = scmp.ge.s32.totalorder %s22, 1
    %s24 = scalar_select %p23, 0, %s22
    %s25 = sadd.s32 1, %s16
    %s26 = scalar_select %p23, %s25, %s16
    %p27 = scmp.ge.s32.totalorder %s26, 2
    %s28 = scalar_select %p27, 0, %s26
    %s29 = ssub.s32 %s16, %s28
    %s30 = ssub.s32 %s17, %s24
    %s31 = sor.u32 %s29, %s30
    %p32 = scmp.eq.s32.totalorder %s31, 0
    %s34 = sadd.s32 %s33, 1
    %s35 = scalar_select %p32, %s33, %s34
    %p38 = pneg %p32
    %p39 = scmp.eq.s32.totalorder %s9, 1
    %p40 = por %p38, %p39
    %p41 = scmp.ne.s32.totalorder %s33, %s36
    %p42 = scmp.eq.s32.totalorder %s9, 0
    %p43 = por %p41, %p42
    %p44 = scmp.ne.s32.totalorder %s33, %s36
    %p45 = scmp.eq.s32.totalorder %s14, 1
    %p46 = por %p44, %p45
    %p47 = scmp.ne.s32.totalorder %s36, %s37
    %p48 = scmp.eq.s32.totalorder %s14, 0
    %p49 = por %p47, %p48
    %p50 = scmp.ne.s32.totalorder %s36, %s37
    %p51 = scmp.eq.s32.totalorder %s15, 1
    %p52 = por %p50, %p51
    %p54 = scmp.ne.s32.totalorder %s37, %s53
    %p55 = scmp.eq.s32.totalorder %s15, 0
    %p56 = por %p54, %p55
    %s58 = sadd.s32 %s57, 1
    %p61 = scmp.eq.s32.totalorder %s9, 1
    %p62 = scmp.ne.s32.totalorder %s57, %s59
    %p63 = scmp.eq.s32.totalorder %s9, 0
    %p64 = por %p62, %p63
    %p65 = scmp.ne.s32.totalorder %s57, %s59
    %p66 = scmp.eq.s32.totalorder %s14, 1
    %p67 = por %p65, %p66
    %p68 = scmp.ne.s32.totalorder %s59, %s60
    %p69 = scmp.eq.s32.totalorder %s14, 0
    %p70 = por %p68, %p69
    %p71 = scmp.ne.s32.totalorder %s59, %s60
    %p72 = scmp.eq.s32.totalorder %s15, 1
    %p73 = por %p71, %p72
    %p75 = scmp.ne.s32.totalorder %s60, %s74
    %p76 = scmp.eq.s32.totalorder %s15, 0
    %p77 = por %p75, %p76
    %s79 = sadd.s32 %s78, 1
    %p82 = scmp.eq.s32.totalorder %s9, 1
    %p83 = scmp.ne.s32.totalorder %s78, %s80
    %p84 = scmp.eq.s32.totalorder %s9, 0
    %p85 = por %p83, %p84
    %p86 = scmp.ne.s32.totalorder %s78, %s80
    %p87 = scmp.eq.s32.totalorder %s14, 1
    %p88 = por %p86, %p87
    %p89 = scmp.ne.s32.totalorder %s80, %s81
    %p90 = scmp.eq.s32.totalorder %s14, 0
    %p91 = por %p89, %p90
    %p92 = scmp.ne.s32.totalorder %s80, %s81
    %p93 = scmp.eq.s32.totalorder %s15, 1
    %p94 = por %p92, %p93
    %p96 = scmp.ne.s32.totalorder %s81, %s95
    %p97 = scmp.eq.s32.totalorder %s15, 0
    %p98 = por %p96, %p97
    %s99 = ssub.s32 %s16, %s28
    %s100 = ssub.s32 %s17, %s24
    %s101 = sor.u32 %s99, %s100
    %p102 = scmp.eq.s32.totalorder %s101, 0
    %s104 = sadd.s32 %s103, 1
    %s105 = scalar_select %p102, %s103, %s104
    %p108 = pneg %p102
    %p109 = scmp.eq.s32.totalorder %s9, 1
    %p110 = por %p108, %p109
    %p111 = scmp.ne.s32.totalorder %s103, %s106
    %p112 = scmp.eq.s32.totalorder %s9, 0
    %p113 = por %p111, %p112
    %p114 = scmp.ne.s32.totalorder %s103, %s106
    %p115 = scmp.eq.s32.totalorder %s14, 1
    %p116 = por %p114, %p115
    %p117 = scmp.ne.s32.totalorder %s106, %s107
    %p118 = scmp.eq.s32.totalorder %s14, 0
    %p119 = por %p117, %p118
    %p120 = scmp.ne.s32.totalorder %s106, %s107
    %p121 = scmp.eq.s32.totalorder %s15, 1
    %p122 = por %p120, %p121
    %p124 = scmp.ne.s32.totalorder %s107, %s123
    %p125 = scmp.eq.s32.totalorder %s15, 0
    %p126 = por %p124, %p125
    %p127 = scmp.le.s32.totalorder 1, %s9
    %p128 = scmp.lt.s32.totalorder %s9, 3
    %p129 = pnand %p127, %p128
    %p130 = pneg %p129
    // Predicated region
    $region9: #{local_cnn_forward.1} parent=5 // pred_check
      _
    $region10: #{local_cnn_forward.1} parent=5 // pred_check_branch
      %132 = sbr.rel (%p129) target = $region12
    $region11: #{local_cnn_forward.1} parent=5 // pred_region
      %s133 = ssub.s32 %s9, 1
      // Predicated region
      $region13: #{local_cnn_forward.1} parent=11 // pred_check
        %p134 = pneg %p70
      $region14: #{local_cnn_forward.1} parent=11 // pred_check_branch
        %136 = sbr.rel (%p134) target = $region16
      $region15: #{local_cnn_forward.1} parent=11 // pred_region
        _
      $region16: #{local_cnn_forward.1} parent=11 // pred_fallthru
        _
      // Predicated region
      $region17: #{local_cnn_forward.1} parent=11 // pred_check
        %p137 = pneg %p91
      $region18: #{local_cnn_forward.1} parent=11 // pred_check_branch
        %139 = sbr.rel (%p137) target = $region20
      $region19: #{local_cnn_forward.1} parent=11 // pred_region
        _
      $region20: #{local_cnn_forward.1} parent=11 // pred_fallthru
        _
    $region12: #{local_cnn_forward.1} parent=5 // pred_fallthru
      _
    %p140 = scmp.lt.s32.totalorder %s9, 2
    // Predicated region
    $region21: #{local_cnn_forward.1} parent=5 // pred_check
      %p141 = pneg %p140
    $region22: #{local_cnn_forward.1} parent=5 // pred_check_branch
      %143 = sbr.rel (%p141) target = $region24
    $region23: #{local_cnn_forward.1} parent=5 // pred_region
      // Predicated region
      $region25: #{local_cnn_forward.1} parent=23 // pred_check
        %p144 = pneg %p43
      $region26: #{local_cnn_forward.1} parent=23 // pred_check_branch
        %146 = sbr.rel (%p144) target = $region28
      $region27: #{local_cnn_forward.1} parent=23 // pred_region
        %s147 = smul.u32 2, %s17
        %p148 = scmp.lt.s32.totalorder %s16, 1
        %s149 = scalar_select %p148, %s16, 1
        %p150 = scmp.lt.s32.totalorder %s147, 1
        %s151 = scalar_select %p150, %s147, 1
        %s152 = smul.addr %s149, 2
        %s153 = sadd.s32 %s151, %s152
        %s154 = smul.addr %s153, 4
        %s155 = scalar_lea.vmem %s0, %s154
        %s156 = smul.u32 2, %s17
      $region28: #{local_cnn_forward.1} parent=23 // pred_fallthru
        _
    $region24: #{local_cnn_forward.1} parent=5 // pred_fallthru
      _
    %p157 = scmp.le.s32.totalorder 1, %s9
    %p158 = scmp.lt.s32.totalorder %s9, 3
    %p159 = pnand %p157, %p158
    %p160 = pneg %p159
    // Predicated region
    $region29: #{local_cnn_forward.1} parent=5 // pred_check
      _
    $region30: #{local_cnn_forward.1} parent=5 // pred_check_branch
      %162 = sbr.rel (%p159) target = $region32
    $region31: #{local_cnn_forward.1} parent=5 // pred_region
      %s163 = ssub.s32 %s9, 1
      %s164 = smul.u32 2, %s19
      %p165 = scmp.lt.s32.totalorder %s18, 1
      %s166 = scalar_select %p165, %s18, 1
      %p167 = scmp.lt.s32.totalorder %s164, 1
      %s168 = scalar_select %p167, %s164, 1
      %s169 = smul.addr %s166, 2
      %s170 = sadd.s32 %s168, %s169
      %s171 = smul.addr %s170, 4
      %s172 = scalar_lea.vmem %s0, %s171
      %p173 = pneg %p49
      %p174 = pneg %p46
      %p175 = pneg %p70
      %p176 = pneg %p67
      %p177 = pneg %p91
      %p178 = pneg %p88
      %p179 = pneg %p119
      %p180 = pneg %p116
      %s181 = smul.u32 2, %s19
      %p182 = scmp.lt.s32.totalorder %s18, 1
      %s183 = scalar_select %p182, %s18, 1
      %p184 = scmp.lt.s32.totalorder %s181, 1
      %s185 = scalar_select %p184, %s181, 1
      %s186 = smul.addr %s183, 2
      %s187 = sadd.s32 %s185, %s186
      %s188 = scalar_lea.vmem %s3, %s187
      %s189 = smul.u32 2, %s19
      %p190 = scmp.lt.s32.totalorder %s18, 1
      %s191 = scalar_select %p190, %s18, 1
      %p192 = scmp.lt.s32.totalorder %s189, 1
      %s193 = scalar_select %p192, %s189, 1
      %s194 = smul.addr %s191, 2
      %s195 = sadd.s32 %s193, %s194
      %s196 = smul.addr %s195, 4
      %s197 = scalar_lea.vmem %s0, %s196
      %s198 = smul.u32 2, %s19
      %s199 = smul.u32 2, %s19
      %p200 = scmp.lt.s32.totalorder %s18, 1
      %s201 = scalar_select %p200, %s18, 1
      %p202 = scmp.lt.s32.totalorder %s199, 1
      %s203 = scalar_select %p202, %s199, 1
      %s204 = smul.addr %s201, 2
      %s205 = sadd.s32 %s203, %s204
      %s206 = scalar_lea.vmem %s3, %s205
      %s207 = smul.u32 2, %s19
      %v208 = vld [vmem:[%s197] sm:$0xff]
      %v209 = vld [vmem:[%s2] sm:$0xff]
      %v210 = vld [vmem:[%s2 + $0x8] sm:$0xf]
      %v211 = vld [vmem:[%s1] sm:$0xff]
      %v212 = vld [vmem:[%s1 + $0x8] sm:$0xf]
      %214 = vset.pattern.permute.xlu0 0
      %215 = vperm.xlu0 %214, %v211
      %v216 = vpop.permute.xlu0 %215
      %219 = vset.pattern.permute.xlu0 0
      %220 = vperm.xlu0 %219, %v212
      %v221 = vpop.permute.xlu0 %220
      %v224 = vlaneseq
      %v225 = vshrl.u32 %v224, 7
      %v226 = vsub.s32 0, %v225
      %v227 = vrot.slane %v208, %v226
      %v228 = vlaneseq
      %v229 = vshrl.u32 %v228, 7
      %v230 = vsub.s32 4, %v229
      %v231 = vrot.slane %v208, %v230
      %v234 = vlaneseq
      %v235 = vshrl.u32 %v234, 7
      %v236 = vsub.s32 0, %v235
      %v237 = vrot.slane %v227, %v236
      %v238 = vlaneseq
      %v239 = vshrl.u32 %v238, 7
      %v240 = vsub.s32 0, %v239
      %v241 = vrot.slane %v231, %v240
      %v242 = vmul.f32 %v216, %v237
      %v243 = vmul.f32 %v216, %v241
      %v244 = vmul.f32 %v221, %v237
      %v245 = vmul.f32 %v221, %v241
      %247 = vset.pattern.permute.xlu0 0
      %248 = vperm.xlu0 %247, %v209
      %v249 = vpop.permute.xlu0 %248
      %252 = vset.pattern.permute.xlu0 0
      %253 = vperm.xlu0 %252, %v210
      %v254 = vpop.permute.xlu0 %253
      %v256 = vadd.f32 %v249, %v242
      %v257 = vadd.f32 %v249, %v243
      %v258 = vadd.f32 %v254, %v244
      %v259 = vadd.f32 %v254, %v245
      %260 = vset.pattern.permute.xlu0 1
      %261 = vperm.xlu0 %260, %v211
      %v262 = vpop.permute.xlu0 %261
      %264 = vset.pattern.permute.xlu0 1
      %265 = vperm.xlu0 %264, %v212
      %v266 = vpop.permute.xlu0 %265
      %v268 = vlaneseq
      %v269 = vshrl.u32 %v268, 7
      %v270 = vsub.s32 1, %v269
      %v271 = vrot.slane %v208, %v270
      %v272 = vlaneseq
      %v273 = vshrl.u32 %v272, 7
      %v274 = vsub.s32 5, %v273
      %v275 = vrot.slane %v208, %v274
      %v278 = vlaneseq
      %v279 = vshrl.u32 %v278, 7
      %v280 = vsub.s32 1, %v279
      %v281 = vrot.slane %v271, %v280
      %v282 = vlaneseq
      %v283 = vshrl.u32 %v282, 7
      %v284 = vsub.s32 1, %v283
      %v285 = vrot.slane %v275, %v284
      %v286 = vmul.f32 %v262, %v281
      %v287 = vmul.f32 %v262, %v285
      %v288 = vmul.f32 %v266, %v281
      %v289 = vmul.f32 %v266, %v285
      %v290 = vadd.f32 %v256, %v286
      %v291 = vadd.f32 %v257, %v287
      %v292 = vadd.f32 %v258, %v288
      %v293 = vadd.f32 %v259, %v289
      %294 = vset.pattern.permute.xlu0 2
      %295 = vperm.xlu0 %294, %v211
      %v296 = vpop.permute.xlu0 %295
      %298 = vset.pattern.permute.xlu0 2
      %299 = vperm.xlu0 %298, %v212
      %v300 = vpop.permute.xlu0 %299
      %v302 = vlaneseq
      %v303 = vshrl.u32 %v302, 7
      %v304 = vsub.s32 2, %v303
      %v305 = vrot.slane %v208, %v304
      %v306 = vlaneseq
      %v307 = vshrl.u32 %v306, 7
      %v308 = vsub.s32 6, %v307
      %v309 = vrot.slane %v208, %v308
      %v312 = vlaneseq
      %v313 = vshrl.u32 %v312, 7
      %v314 = vsub.s32 2, %v313
      %v315 = vrot.slane %v305, %v314
      %v316 = vlaneseq
      %v317 = vshrl.u32 %v316, 7
      %v318 = vsub.s32 2, %v317
      %v319 = vrot.slane %v309, %v318
      %v320 = vmul.f32 %v296, %v315
      %v321 = vmul.f32 %v296, %v319
      %v322 = vmul.f32 %v300, %v315
      %v323 = vmul.f32 %v300, %v319
      %v324 = vadd.f32 %v290, %v320
      %v325 = vadd.f32 %v291, %v321
      %v326 = vadd.f32 %v292, %v322
      %v327 = vadd.f32 %v293, %v323
      %328 = vset.pattern.permute.xlu0 3
      %329 = vperm.xlu0 %328, %v211
      %v330 = vpop.permute.xlu0 %329
      %332 = vset.pattern.permute.xlu0 3
      %333 = vperm.xlu0 %332, %v212
      %v334 = vpop.permute.xlu0 %333
      %v336 = vlaneseq
      %v337 = vshrl.u32 %v336, 7
      %v338 = vsub.s32 3, %v337
      %v339 = vrot.slane %v208, %v338
      %v340 = vlaneseq
      %v341 = vshrl.u32 %v340, 7
      %v342 = vsub.s32 7, %v341
      %v343 = vrot.slane %v208, %v342
      %v346 = vlaneseq
      %v347 = vshrl.u32 %v346, 7
      %v348 = vsub.s32 3, %v347
      %v349 = vrot.slane %v339, %v348
      %v350 = vlaneseq
      %v351 = vshrl.u32 %v350, 7
      %v352 = vsub.s32 3, %v351
      %v353 = vrot.slane %v343, %v352
      %v354 = vmul.f32 %v330, %v349
      %v355 = vmul.f32 %v330, %v353
      %v356 = vmul.f32 %v334, %v349
      %v357 = vmul.f32 %v334, %v353
      %v358 = vadd.f32 %v324, %v354
      %v359 = vadd.f32 %v325, %v355
      %v360 = vadd.f32 %v326, %v356
      %v361 = vadd.f32 %v327, %v357
      %vm362 = vcmask 1043456
      %v363 = vsel %vm362, %v360, -inf
      %v364 = vmax.f32 %v358, %v363
      %v365 = vrot.slane %v364, 4
      %v366 = vmax.f32 %v364, %v365
      %v367 = vrot.slane %v366, 2
      %v368 = vmax.f32 %v366, %v367
      %v369 = vrot.slane %v368, 1
      %v370 = vmax.f32 %v368, %v369
      %v371 = vsel %vm362, %v361, -inf
      %v372 = vmax.f32 %v359, %v371
      %v373 = vrot.slane %v372, 4
      %v374 = vmax.f32 %v372, %v373
      %v375 = vrot.slane %v374, 2
      %v376 = vmax.f32 %v374, %v375
      %v377 = vrot.slane %v376, 1
      %v378 = vmax.f32 %v376, %v377
      %v379 = vxor.u32 %v370, 2147483648
      %v380 = vxor.u32 %v378, 2147483648
      %v381 = vmul.f32 %v379, 1.442695
      %v382 = vpow.pop %v381
      %v383 = vmul.f32 %v380, 1.442695
      %v384 = vpow.pop %v383
      %v385 = vadd.f32 %v382, 1.0
      %v386 = vadd.f32 %v384, 1.0
      %v387 = vrcp.pop %v385
      %v388 = vmul.f32 1.0, %v387
      %v389 = vrcp.pop %v386
      %v390 = vmul.f32 1.0, %v389
      %v393 = vcombine.low %v388, %v390
      %v395 = vunpack.c.l.s4 1966171168
      %v396 = vunpack.c.0.s8 %v395
      %v397 = vlaneseq
      %v398 = vshrl.u32 %v397, 7
      %v399 = vsub.s32 %v396, %v398
      %v400 = vrot.slane %v393, %v399
      %v402 = vunpack.c.l.s4 1966171168
      %v403 = vunpack.c.0.s8 %v402
      %v404 = vlaneseq
      %v405 = vshrl.u32 %v404, 7
      %v406 = vsub.s32 %v403, %v405
      %v407 = vrot.slane %v400, %v406
      %v409 = vlaneseq
      %vm410 = vcmp.ge.s32.totalorder %v409, 0
      %vm411 = vcmp.lt.s32.totalorder %v409, 256
      %vm412 = vmand %vm410, %vm411
      %413 = vst.msk [vmem:[%s206] sm:$0x3] %vm412, %v407
      %s414 = smul.u32 2, %s19
      %p415 = scmp.lt.s32.totalorder %s18, 1
      %s416 = scalar_select %p415, %s18, 1
      %p417 = scmp.lt.s32.totalorder %s414, 1
      %s418 = scalar_select %p417, %s414, 1
      %s419 = smul.addr %s416, 2
      %s420 = sadd.s32 %s418, %s419
      %s421 = scalar_lea.vmem %s3, %s420
      // Predicated region
      $region33: #{local_cnn_forward.1} parent=31 // pred_check
        %p422 = pneg %p116
      $region34: #{local_cnn_forward.1} parent=31 // pred_check_branch
        %424 = sbr.rel (%p422) target = $region36
      $region35: #{local_cnn_forward.1} parent=31 // pred_region
        %s425 = smul.u32 2, %s19
      $region36: #{local_cnn_forward.1} parent=31 // pred_fallthru
        _
    $region32: #{local_cnn_forward.1} parent=5 // pred_fallthru
      _
    %p426 = scmp.le.s32.totalorder 2, %s9
    // Predicated region
    $region37: #{local_cnn_forward.1} parent=5 // pred_check
      %p427 = pneg %p426
    $region38: #{local_cnn_forward.1} parent=5 // pred_check_branch
      %429 = sbr.rel (%p427) target = $region40
    $region39: #{local_cnn_forward.1} parent=5 // pred_region
      %s430 = ssub.s32 %s9, 2
      // Predicated region
      $region41: #{local_cnn_forward.1} parent=39 // pred_check
        %p431 = pneg %p122
      $region42: #{local_cnn_forward.1} parent=39 // pred_check_branch
        %433 = sbr.rel (%p431) target = $region44
      $region43: #{local_cnn_forward.1} parent=39 // pred_region
        %s434 = smul.u32 2, %s21
        %p435 = scmp.lt.s32.totalorder %s20, 1
        %s436 = scalar_select %p435, %s20, 1
        %p437 = scmp.lt.s32.totalorder %s434, 1
        %s438 = scalar_select %p437, %s434, 1
        %s439 = smul.addr %s436, 2
        %s440 = sadd.s32 %s438, %s439
        %s441 = scalar_lea.vmem %s3, %s440
      $region44: #{local_cnn_forward.1} parent=39 // pred_fallthru
        _
    $region40: #{local_cnn_forward.1} parent=5 // pred_fallthru
      _
  $region6: #{local_cnn_forward.1} parent=0 // loop_footer
    %s13 = sadd.s32 1, %s9
  $region7: #{local_cnn_forward.1} parent=0 // loop_footer_branch
    %8 = sbr.rel target = $region3
  $region8: #{local_cnn_forward.1} parent=0 // loop_exit
    _

</llo_original>
